<compile_context>
chip_gen: v5e
topology: v5e:2x2
jax: 0.10.0
libtpu: 0.0.40
codegen_flags: <defaults>
</compile_context>

<pallas_src>
import numpy as np
import jax
import jax.numpy as jnp
from jax import lax
from jax.experimental import pallas as pl
from jax.experimental.pallas import tpu as pltpu


def _round_up(v, m):
    return (v + m - 1) // m * m


# --------------------------------------------------------------------------
# Kernel
# --------------------------------------------------------------------------
def _make_actor_kernel(P, nb_actions):
    """P: padded feature width (multiple of 128). nb_actions: true action count."""

    def kernel(x_ref, w_ref, b_ref, o_ref):
        x = x_ref[...]                                                   # (TB, P) bf16
        # fc1 + relu  (MXU in bf16, accumulate f32, elementwise f32)
        h1 = jnp.dot(x, w_ref[0:P, :], preferred_element_type=jnp.float32)
        h1 = jnp.maximum(h1 + b_ref[0:1, :], 0.0).astype(jnp.bfloat16)
        # fc2 + relu
        h2 = jnp.dot(h1, w_ref[P:2 * P, :], preferred_element_type=jnp.float32)
        h2 = jnp.maximum(h2 + b_ref[8:9, :], 0.0).astype(jnp.bfloat16)
        # fc3
        logits = jnp.dot(h2, w_ref[2 * P:3 * P, :],
                         preferred_element_type=jnp.float32)
        logits = logits + b_ref[16:17, :]
        # Mask padded action lanes so they don't pollute the softmax max/sum.
        col = lax.broadcasted_iota(jnp.int32, logits.shape, 1)
        logits = jnp.where(col < nb_actions, logits, jnp.float32(-1e30))
        # Numerically-stable softmax along the action axis.
        m = jnp.max(logits, axis=-1, keepdims=True)
        e = jnp.exp(logits - m)
        denom = jnp.sum(e, axis=-1, keepdims=True)
        o_ref[...] = (e * pl.reciprocal(denom, approx=True)).astype(o_ref.dtype)

    return kernel


# --------------------------------------------------------------------------
# Parameter init (faithful to PyTorch Actor.__init__/init_weights) + packing
# --------------------------------------------------------------------------
def init_actor_params(key, nb_states, nb_actions, hidden1=64, hidden2=48,
                      init_w=0.003):
    """PyTorch Linear stores weight as [out, in]; fanin_init uses size[0] (=out)
    as the fan-in, reproduced here. Returned weights are transposed to [in, out]."""
    ks = jax.random.split(key, 6)

    def u(k, shape, bound):
        return jax.random.uniform(k, shape, jnp.float32, -bound, bound)

    w1_t = u(ks[0], (hidden1, nb_states), 1.0 / np.sqrt(hidden1))
    b1 = u(ks[1], (1, hidden1), 1.0 / np.sqrt(nb_states))   # default Linear bias init
    w2_t = u(ks[2], (hidden2, hidden1), 1.0 / np.sqrt(hidden2))
    b2 = u(ks[3], (1, hidden2), 1.0 / np.sqrt(hidden1))
    w3_t = u(ks[4], (nb_actions, hidden2), init_w)
    b3 = u(ks[5], (1, nb_actions), 1.0 / np.sqrt(hidden2))

    return {
        "w1": jnp.transpose(w1_t), "b1": b1,   # [nb_states, hidden1]
        "w2": jnp.transpose(w2_t), "b2": b2,   # [hidden1,   hidden2]
        "w3": jnp.transpose(w3_t), "b3": b3,   # [hidden2,   nb_actions]
    }


def pack_actor_params(params):
    """Pad every feature dim to a common multiple of 128 lanes and pack:
       - weights -> one bf16 buffer of shape (3P, P)
       - biases  -> one f32 buffer of shape (24, P) (rows 0 / 8 / 16, 8-aligned)."""
    nb_states, hidden1 = params["w1"].shape
    hidden2 = params["w2"].shape[1]
    nb_actions = params["w3"].shape[1]
    P = _round_up(max(nb_states, hidden1, hidden2, nb_actions), 128)

    def pad2(a):
        out = jnp.zeros((P, P), jnp.float32)
        return out.at[:a.shape[0], :a.shape[1]].set(a)

    w_packed = jnp.concatenate(
        [pad2(params["w1"]), pad2(params["w2"]), pad2(params["w3"])], axis=0
    ).astype(jnp.bfloat16)                                            # (3P, P)

    b_packed = jnp.zeros((24, P), jnp.float32)
    b_packed = b_packed.at[0, :hidden1].set(params["b1"][0])
    b_packed = b_packed.at[8, :hidden2].set(params["b2"][0])
    b_packed = b_packed.at[16, :nb_actions].set(params["b3"][0])

    return {"w_packed": w_packed, "b_packed": b_packed,
            "P": P, "nb_states": nb_states, "nb_actions": nb_actions}


# --------------------------------------------------------------------------
# Forward wrapper
# --------------------------------------------------------------------------
def actor_forward(x, packed, *, block_b=None):
    """x: [B, nb_states] float32. packed: output of pack_actor_params."""
    B, _ = x.shape
    P = packed["P"]
    nb_states = packed["nb_states"]
    nb_actions = packed["nb_actions"]

    if block_b is None:
        # Feed the MXU with big row tiles when the batch allows it.
        block_b = 256 if B >= 256 else _round_up(B, 8)
    block_b = max(8, _round_up(block_b, 8))
    B_pad = _round_up(B, block_b)
    grid = (B_pad // block_b,)

    # Pad batch + feature lanes, cast matmul input to bf16.
    xp = jnp.zeros((B_pad, P), jnp.bfloat16)
    xp = xp.at[:B, :nb_states].set(x.astype(jnp.bfloat16))

    kernel = _make_actor_kernel(P, nb_actions)

    out = pl.pallas_call(
        kernel,
        out_shape=jax.ShapeDtypeStruct((B_pad, P), jnp.float32),
        grid=grid,
        in_specs=[
            pl.BlockSpec((block_b, P), lambda i: (i, 0)),      # x: tiled over batch
            pl.BlockSpec((3 * P, P), lambda i: (0, 0)),        # weights: VMEM-resident
            pl.BlockSpec((24, P), lambda i: (0, 0)),           # biases:  VMEM-resident
        ],
        out_specs=pl.BlockSpec((block_b, P), lambda i: (i, 0)),
        compiler_params=pltpu.CompilerParams(
            dimension_semantics=("parallel",),                 # megacore on v7x
            vmem_limit_bytes=32 * 1024 * 1024,                 # explicit; tiny footprint
        ),
    )(xp, packed["w_packed"], packed["b_packed"])

    return out[:B, :nb_actions]


# --------------------------------------------------------------------------
# Plain-JAX f32 reference
# --------------------------------------------------------------------------
def actor_reference(x, params):
    h1 = jnp.maximum(x @ params["w1"] + params["b1"], 0.0)
    h2 = jnp.maximum(h1 @ params["w2"] + params["b2"], 0.0)
    logits = h2 @ params["w3"] + params["b3"]
    return jax.nn.softmax(logits, axis=-1)


if __name__ == "__main__":
    key = jax.random.PRNGKey(0)
    k_params, k_x = jax.random.split(key)

    batch, nb_states, nb_actions = 40, 32, 16
    hidden1, hidden2 = 64, 48

    params = init_actor_params(k_params, nb_states, nb_actions, hidden1, hidden2)
    packed = pack_actor_params(params)
    x = jax.random.normal(k_x, (batch, nb_states), dtype=jnp.float32)

    # block_b=16 -> grid=(3,): exercises batch tiling, remainder padding,
    # resident-weight blocks, and the parallel grid axis.
    out = actor_forward(x, packed, block_b=16)
    out = jax.block_until_ready(out)

    ref = actor_reference(x, params)
    # bf16 matmul inputs + approx reciprocal -> slightly looser tolerances.
    np.testing.assert_allclose(np.asarray(out), np.asarray(ref),
                               rtol=5e-2, atol=5e-3)
    np.testing.assert_allclose(np.asarray(out).sum(axis=-1), np.ones(batch),
                               rtol=5e-3, atol=5e-3)

    print("KERNEL_OK")
</pallas_src>

<mosaic_0001>
module attributes {stable_mosaic.version = 11 : i64} {
  func.func @kernel(%arg0: i32, %arg1: memref<16x128xbf16, #tpu.memory_space<vmem>>, %arg2: memref<384x128xbf16, #tpu.memory_space<vmem>>, %arg3: memref<24x128xf32, #tpu.memory_space<vmem>>, %arg4: memref<16x128xf32, #tpu.memory_space<vmem>>) attributes {dimension_semantics = [#tpu.dimension_semantics<parallel>], iteration_bounds = array<i64: 3>, scalar_prefetch = 0 : i64, scratch_operands = 0 : i64, tpu.core_type = #tpu.core_type<tc>, window_params = [{transform_indices = @transform_0, window_bounds = array<i64: 16, 128>}, {pipeline_mode = #tpu.pipeline_mode<synchronous>, transform_indices = @transform_1, window_bounds = array<i64: 384, 128>}, {pipeline_mode = #tpu.pipeline_mode<synchronous>, transform_indices = @transform_2, window_bounds = array<i64: 24, 128>}, {transform_indices = @transform_3, window_bounds = array<i64: 16, 128>}]} {
    %c0 = arith.constant 0 : index
    %c0_0 = arith.constant 0 : index
    %0 = vector.load %arg1[%c0, %c0_0] : memref<16x128xbf16, #tpu.memory_space<vmem>>, vector<16x128xbf16>
    %c0_1 = arith.constant 0 : index
    %c0_2 = arith.constant 0 : index
    %1 = vector.load %arg2[%c0_1, %c0_2] : memref<384x128xbf16, #tpu.memory_space<vmem>>, vector<128x128xbf16>
    %cst = arith.constant dense<0.000000e+00> : vector<16x128xf32>
    %2 = tpu.matmul %0, %1, %cst {dimension_numbers = #tpu.dot_dimension_numbers<[1], [0], [0], [1], [0, 0, 1, 1], [], []>} : vector<16x128xbf16>, vector<128x128xbf16>, vector<16x128xf32> -> vector<16x128xf32>
    %c0_3 = arith.constant 0 : index
    %c0_4 = arith.constant 0 : index
    %3 = vector.load %arg3[%c0_3, %c0_4] : memref<24x128xf32, #tpu.memory_space<vmem>>, vector<1x128xf32>
    %4 = vector.broadcast %3 : vector<1x128xf32> to vector<16x128xf32>
    %5 = arith.addf %2, %4 : vector<16x128xf32>
    %cst_5 = arith.constant 0.000000e+00 : f32
    %6 = vector.broadcast %cst_5 : f32 to vector<16x128xf32>
    %7 = arith.maximumf %5, %6 : vector<16x128xf32>
    %8 = arith.truncf %7 : vector<16x128xf32> to vector<16x128xbf16>
    %c128 = arith.constant 128 : index
    %c0_6 = arith.constant 0 : index
    %9 = vector.load %arg2[%c128, %c0_6] : memref<384x128xbf16, #tpu.memory_space<vmem>>, vector<128x128xbf16>
    %cst_7 = arith.constant dense<0.000000e+00> : vector<16x128xf32>
    %10 = tpu.matmul %8, %9, %cst_7 {dimension_numbers = #tpu.dot_dimension_numbers<[1], [0], [0], [1], [0, 0, 1, 1], [], []>} : vector<16x128xbf16>, vector<128x128xbf16>, vector<16x128xf32> -> vector<16x128xf32>
    %c8 = arith.constant 8 : index
    %c0_8 = arith.constant 0 : index
    %11 = vector.load %arg3[%c8, %c0_8] : memref<24x128xf32, #tpu.memory_space<vmem>>, vector<1x128xf32>
    %12 = vector.broadcast %11 : vector<1x128xf32> to vector<16x128xf32>
    %13 = arith.addf %10, %12 : vector<16x128xf32>
    %cst_9 = arith.constant 0.000000e+00 : f32
    %14 = vector.broadcast %cst_9 : f32 to vector<16x128xf32>
    %15 = arith.maximumf %13, %14 : vector<16x128xf32>
    %16 = arith.truncf %15 : vector<16x128xf32> to vector<16x128xbf16>
    %c256 = arith.constant 256 : index
    %c0_10 = arith.constant 0 : index
    %17 = vector.load %arg2[%c256, %c0_10] : memref<384x128xbf16, #tpu.memory_space<vmem>>, vector<128x128xbf16>
    %cst_11 = arith.constant dense<0.000000e+00> : vector<16x128xf32>
    %18 = tpu.matmul %16, %17, %cst_11 {dimension_numbers = #tpu.dot_dimension_numbers<[1], [0], [0], [1], [0, 0, 1, 1], [], []>} : vector<16x128xbf16>, vector<128x128xbf16>, vector<16x128xf32> -> vector<16x128xf32>
    %c16 = arith.constant 16 : index
    %c0_12 = arith.constant 0 : index
    %19 = vector.load %arg3[%c16, %c0_12] : memref<24x128xf32, #tpu.memory_space<vmem>>, vector<1x128xf32>
    %20 = vector.broadcast %19 : vector<1x128xf32> to vector<16x128xf32>
    %21 = arith.addf %18, %20 : vector<16x128xf32>
    %22 = tpu.iota {dimensions = array<i32: 1>} : vector<16x128xi32>
    %c16_i32 = arith.constant 16 : i32
    %23 = vector.broadcast %c16_i32 : i32 to vector<16x128xi32>
    %24 = arith.cmpi slt, %22, %23 : vector<16x128xi32>
    %cst_13 = arith.constant -1.000000e+30 : f32
    %25 = vector.broadcast %cst_13 : f32 to vector<16x128xf32>
    %26 = arith.select %24, %21, %25 : vector<16x128xi1>, vector<16x128xf32>
    %cst_14 = arith.constant dense<0xFF800000> : vector<16xf32>
    %27 = vector.multi_reduction <maximumf>, %26, %cst_14 [1] : vector<16x128xf32> to vector<16xf32>
    %28 = vector.shape_cast %27 : vector<16xf32> to vector<16x1xf32>
    %29 = vector.broadcast %28 : vector<16x1xf32> to vector<16x128xf32>
    %30 = arith.subf %26, %29 : vector<16x128xf32>
    %31 = math.exp %30 : vector<16x128xf32>
    %cst_15 = arith.constant dense<0.000000e+00> : vector<16xf32>
    %32 = vector.multi_reduction <add>, %31, %cst_15 [1] : vector<16x128xf32> to vector<16xf32>
    %33 = vector.shape_cast %32 : vector<16xf32> to vector<16x1xf32>
    %34 = tpu.reciprocal %33 {approx = true} : vector<16x1xf32> -> vector<16x1xf32>
    %35 = vector.broadcast %34 : vector<16x1xf32> to vector<16x128xf32>
    %36 = arith.mulf %31, %35 : vector<16x128xf32>
    %c0_16 = arith.constant 0 : index
    %c0_17 = arith.constant 0 : index
    %37 = vector.load %arg4[%c0_16, %c0_17] : memref<16x128xf32, #tpu.memory_space<vmem>>, vector<16x128xf32>
    tpu.vector_store %arg4[%c0_16, %c0_17], %36 {strides = array<i32>} : memref<16x128xf32, #tpu.memory_space<vmem>>, vector<16x128xf32>,
    return
  }
  func.func @transform_0(%arg0: i32) -> (i32, i32) {
    %c0_i32 = arith.constant 0 : i32
    %c0_i32_0 = arith.constant 0 : i32
    return %arg0, %c0_i32 : i32, i32
  }
  func.func @transform_1(%arg0: i32) -> (i32, i32) {
    %c0_i32 = arith.constant 0 : i32
    %c0_i32_0 = arith.constant 0 : i32
    %c0_i32_1 = arith.constant 0 : i32
    return %c0_i32, %c0_i32_0 : i32, i32
  }
  func.func @transform_2(%arg0: i32) -> (i32, i32) {
    %c0_i32 = arith.constant 0 : i32
    %c0_i32_0 = arith.constant 0 : i32
    %c0_i32_1 = arith.constant 0 : i32
    return %c0_i32, %c0_i32_0 : i32, i32
  }
  func.func @transform_3(%arg0: i32) -> (i32, i32) {
    %c0_i32 = arith.constant 0 : i32
    %c0_i32_0 = arith.constant 0 : i32
    return %arg0, %c0_i32 : i32, i32
  }
}

</mosaic_0001>

<llo_original>
// kernel: tpu_custom_call.1
$region0: #{tpu_custom_call.1}
  #allocation0 [shape = 'u32[]', space=smem, size = 0x4, offset = 0x4, fixed_abs, tag = 'smem constant byte address 0x4 - core index']
  #allocation1 [shape = 'u32[72,128]{1,0:T(1,128)}', space=vmem, size = 0x9000, scoped, tag = 'internal scratch']
  %s0 = inlined_call_operand.hbm [shape: bf16[48,128], index: 0, kind: input, shape index: {}]
  %s1 = inlined_call_operand.hbm [shape: bf16[384,128], index: 1, kind: input, shape index: {}]
  %s2 = inlined_call_operand.hbm [shape: f32[24,128], index: 2, kind: input, shape index: {}]
  %s3 = inlined_call_operand.hbm [shape: f32[48,128], index: 3, kind: output, shape index: {}]
  %s4 = sld [smem:[#allocation0]]
  $region57: #{tpu_custom_call.1} parent=0
    _
  %s6 = ssub.s32 1, %s4
  %s7 = scalar_select 0, %s6, %s4
  $region1: #{tpu_custom_call.1} parent=0
    #allocation2 [shape = 'u8[8192]{0}', space=vmem, size = 0x2000, scoped, tag = 'input window, operand 0']
    #allocation3 [shape = 's32[2]{0}', space=sflag, size = 0x8, scoped, tag = 'scoped memory for tpu_custom_call.1']
    #allocation4 [shape = 's32[2]{0}', space=sflag, size = 0x8, scoped, tag = 'scoped memory for tpu_custom_call.1']
    #allocation5 [shape = 'u8[98304]{0}', space=vmem, size = 0x18000, scoped, tag = 'input window, operand 1, single buffered']
    #allocation6 [shape = 's32[1]{0}', space=sflag, size = 0x4, scoped, tag = 'scoped memory for tpu_custom_call.1']
    #allocation7 [shape = 'u8[12288]{0}', space=vmem, size = 0x3000, scoped, tag = 'input window, operand 2, single buffered']
    #allocation8 [shape = 'u8[16384]{0}', space=vmem, size = 0x4000, scoped, tag = 'output window, operand 0']
    %8 = vsyncpa [#allocation3], 0
    %s9 = scalar_lea.sflag [#allocation3], 1
    %10 = vsyncpa %s9, 0
    %11 = vsyncpa [#allocation6], 0
    %12 = vsyncpa [#allocation4], 0
    %s13 = scalar_lea.sflag [#allocation4], 1
    %14 = vsyncpa %s13, 0
    loop: start=0, step=1, limit=5
    $region2: #{tpu_custom_call.1} parent=1 // loop_pre_header
      _
    $region3: #{tpu_custom_call.1} parent=1 // loop_header
      %s16 = sphi 0, %s20
      %p17 = scmp.ge.s32.totalorder %s16, 5
      %s26 = sphi 0, %s28
      %s29 = sphi 0, %s26
      %s30 = sphi 0, %s29
      %s46 = sphi 0, %s30
      %s50 = sphi 0, %s50
      %s52 = sphi 0, %s50
      %s53 = sphi 0, %s52
      %s67 = sphi 0, %s53
      %s71 = sphi 0, %s71
      %s73 = sphi 0, %s71
      %s74 = sphi 0, %s73
      %s88 = sphi 0, %s74
      %s94 = sphi 0, %s96
      %s97 = sphi 0, %s94
      %s98 = sphi 0, %s97
      %s114 = sphi 0, %s98
    $region4: #{tpu_custom_call.1} parent=1 // loop_header_branch
      %19 = sbr.rel (%p17) target = $region8
    $region5: #{tpu_custom_call.1} parent=1 // loop_body
      %s21 = ssub.s32 %s16, 1
      %s22 = ssub.s32 %s16, 2
      %s23 = sadd.s32 %s16, 1
      %s24 = ssub.s32 %s16, %s23
      %p25 = scmp.eq.s32.totalorder %s24, 0
      %s27 = sadd.s32 %s26, 1
      %s28 = scalar_select %p25, %s26, %s27
      %p31 = pneg %p25
      %p32 = scmp.eq.s32.totalorder %s16, 2
      %p33 = por %p31, %p32
      %p34 = scmp.ne.s32.totalorder %s26, %s29
      %p35 = scmp.eq.s32.totalorder %s16, 0
      %p36 = por %p34, %p35
      %p37 = scmp.ne.s32.totalorder %s26, %s29
      %p38 = scmp.eq.s32.totalorder %s21, 2
      %p39 = por %p37, %p38
      %p40 = scmp.ne.s32.totalorder %s29, %s30
      %p41 = scmp.eq.s32.totalorder %s21, 0
      %p42 = por %p40, %p41
      %p43 = scmp.ne.s32.totalorder %s29, %s30
      %p44 = scmp.eq.s32.totalorder %s22, 2
      %p45 = por %p43, %p44
      %p47 = scmp.ne.s32.totalorder %s30, %s46
      %p48 = scmp.eq.s32.totalorder %s22, 0
      %p49 = por %p47, %p48
      %s51 = sadd.s32 %s50, 1
      %p54 = scmp.eq.s32.totalorder %s16, 2
      %p55 = scmp.ne.s32.totalorder %s50, %s52
      %p56 = scmp.eq.s32.totalorder %s16, 0
      %p57 = por %p55, %p56
      %p58 = scmp.ne.s32.totalorder %s50, %s52
      %p59 = scmp.eq.s32.totalorder %s21, 2
      %p60 = por %p58, %p59
      %p61 = scmp.ne.s32.totalorder %s52, %s53
      %p62 = scmp.eq.s32.totalorder %s21, 0
      %p63 = por %p61, %p62
      %p64 = scmp.ne.s32.totalorder %s52, %s53
      %p65 = scmp.eq.s32.totalorder %s22, 2
      %p66 = por %p64, %p65
      %p68 = scmp.ne.s32.totalorder %s53, %s67
      %p69 = scmp.eq.s32.totalorder %s22, 0
      %p70 = por %p68, %p69
      %s72 = sadd.s32 %s71, 1
      %p75 = scmp.eq.s32.totalorder %s16, 2
      %p76 = scmp.ne.s32.totalorder %s71, %s73
      %p77 = scmp.eq.s32.totalorder %s16, 0
      %p78 = por %p76, %p77
      %p79 = scmp.ne.s32.totalorder %s71, %s73
      %p80 = scmp.eq.s32.totalorder %s21, 2
      %p81 = por %p79, %p80
      %p82 = scmp.ne.s32.totalorder %s73, %s74
      %p83 = scmp.eq.s32.totalorder %s21, 0
      %p84 = por %p82, %p83
      %p85 = scmp.ne.s32.totalorder %s73, %s74
      %p86 = scmp.eq.s32.totalorder %s22, 2
      %p87 = por %p85, %p86
      %p89 = scmp.ne.s32.totalorder %s74, %s88
      %p90 = scmp.eq.s32.totalorder %s22, 0
      %p91 = por %p89, %p90
      %s92 = ssub.s32 %s16, %s23
      %p93 = scmp.eq.s32.totalorder %s92, 0
      %s95 = sadd.s32 %s94, 1
      %s96 = scalar_select %p93, %s94, %s95
      %p99 = pneg %p93
      %p100 = scmp.eq.s32.totalorder %s16, 2
      %p101 = por %p99, %p100
      %p102 = scmp.ne.s32.totalorder %s94, %s97
      %p103 = scmp.eq.s32.totalorder %s16, 0
      %p104 = por %p102, %p103
      %p105 = scmp.ne.s32.totalorder %s94, %s97
      %p106 = scmp.eq.s32.totalorder %s21, 2
      %p107 = por %p105, %p106
      %p108 = scmp.ne.s32.totalorder %s97, %s98
      %p109 = scmp.eq.s32.totalorder %s21, 0
      %p110 = por %p108, %p109
      %p111 = scmp.ne.s32.totalorder %s97, %s98
      %p112 = scmp.eq.s32.totalorder %s22, 2
      %p113 = por %p111, %p112
      %p115 = scmp.ne.s32.totalorder %s98, %s114
      %p116 = scmp.eq.s32.totalorder %s22, 0
      %p117 = por %p115, %p116
      %p118 = scmp.le.s32.totalorder 1, %s16
      %p119 = scmp.lt.s32.totalorder %s16, 4
      %p120 = pnand %p118, %p119
      %p121 = pneg %p120
      // Predicated region
      $region9: #{tpu_custom_call.1} parent=5 // pred_check
        _
      $region10: #{tpu_custom_call.1} parent=5 // pred_check_branch
        %123 = sbr.rel (%p120) target = $region12
      $region11: #{tpu_custom_call.1} parent=5 // pred_region
        %s124 = ssub.s32 %s16, 1
        // Predicated region
        $region13: #{tpu_custom_call.1} parent=11 // pred_check
          %p125 = pneg %p63
        $region14: #{tpu_custom_call.1} parent=11 // pred_check_branch
          %127 = sbr.rel (%p125) target = $region16
        $region15: #{tpu_custom_call.1} parent=11 // pred_region
          %129 = vsyncadd [#allocation6], 0
          %s130 = sshll.u32 %s1, 4
          %s131 = int_to_ptr.hbm [resolvable:$true] %s130
          %s132 = sshll.u32 [#allocation5], 4
          %s133 = int_to_ptr.vmem [resolvable:$true] %s132
          %138 = dma.hbm_to_vmem [thread:$0]  %s131, 3072, %s133, [#allocation6], 64, 64, 4
        $region16: #{tpu_custom_call.1} parent=11 // pred_fallthru
          _
        // Predicated region
        $region17: #{tpu_custom_call.1} parent=11 // pred_check
          %p139 = pneg %p84
        $region18: #{tpu_custom_call.1} parent=11 // pred_check_branch
          %141 = sbr.rel (%p139) target = $region20
        $region19: #{tpu_custom_call.1} parent=11 // pred_region
          %143 = vsyncadd [#allocation6], 0
          %s144 = sshll.u32 %s2, 4
          %s145 = int_to_ptr.hbm [resolvable:$true] %s144
          %s146 = sshll.u32 [#allocation7], 4
          %s147 = int_to_ptr.vmem [resolvable:$true] %s146
          %152 = dma.hbm_to_vmem [thread:$0]  %s145, 384, %s147, [#allocation6], 128, 128, 8
        $region20: #{tpu_custom_call.1} parent=11 // pred_fallthru
          _
      $region12: #{tpu_custom_call.1} parent=5 // pred_fallthru
        _
      %p153 = scmp.lt.s32.totalorder %s16, 3
      // Predicated region
      $region21: #{tpu_custom_call.1} parent=5 // pred_check
        %p154 = pneg %p153
      $region22: #{tpu_custom_call.1} parent=5 // pred_check_branch
        %156 = sbr.rel (%p154) target = $region24
      $region23: #{tpu_custom_call.1} parent=5 // pred_region
        // Predicated region
        $region25: #{tpu_custom_call.1} parent=23 // pred_check
          %p157 = pneg %p36
        $region26: #{tpu_custom_call.1} parent=23 // pred_check_branch
          %159 = sbr.rel (%p157) target = $region28
        $region27: #{tpu_custom_call.1} parent=23 // pred_region
          %s160 = sand.u32 %s26, 1
          %s161 = scalar_lea.sflag [#allocation3], %s160
          %s162 = sand.u32 %s26, 1
          %s163 = smul.addr %s162, 8
          %s164 = scalar_lea.vmem [#allocation2], %s163
          %s165 = smul.u32 2, %s16
          %167 = vsyncadd %s161, 0
          %s168 = smul.addr %s165, 4
          %s169 = scalar_lea.hbm %s0, %s168
          %s170 = sshll.u32 %s169, 4
          %s171 = int_to_ptr.hbm [resolvable:$true] %s170
          %s172 = sshll.u32 %s164, 4
          %s173 = int_to_ptr.vmem [resolvable:$true] %s172
          %178 = dma.hbm_to_vmem [thread:$0]  %s171, 128, %s173, %s161, 64, 64, 4
        $region28: #{tpu_custom_call.1} parent=23 // pred_fallthru
          _
      $region24: #{tpu_custom_call.1} parent=5 // pred_fallthru
        _
      %p179 = scmp.le.s32.totalorder 1, %s16
      %p180 = scmp.lt.s32.totalorder %s16, 4
      %p181 = pnand %p179, %p180
      %p182 = pneg %p181
      // Predicated region
      $region29: #{tpu_custom_call.1} parent=5 // pred_check
        _
      $region30: #{tpu_custom_call.1} parent=5 // pred_check_branch
        %184 = sbr.rel (%p181) target = $region32
      $region31: #{tpu_custom_call.1} parent=5 // pred_region
        %s185 = ssub.s32 %s16, 1
        %s186 = sand.u32 %s29, 1
        %s187 = scalar_lea.sflag [#allocation3], %s186
        %s188 = sand.u32 %s29, 1
        %s189 = smul.addr %s188, 8
        %s190 = scalar_lea.vmem [#allocation2], %s189
        // Predicated region
        $region33: #{tpu_custom_call.1} parent=31 // pred_check
          %p191 = pneg %p42
        $region34: #{tpu_custom_call.1} parent=31 // pred_check_branch
          %193 = sbr.rel (%p191) target = $region36
        $region35: #{tpu_custom_call.1} parent=31 // pred_region
          %195 = dma.done %s187, 128
        $region36: #{tpu_custom_call.1} parent=31 // pred_fallthru
          _
        // Predicated region
        $region37: #{tpu_custom_call.1} parent=31 // pred_check
          %p196 = pneg %p63
        $region38: #{tpu_custom_call.1} parent=31 // pred_check_branch
          %198 = sbr.rel (%p196) target = $region40
        $region39: #{tpu_custom_call.1} parent=31 // pred_region
          %200 = dma.done [#allocation6], 3072
        $region40: #{tpu_custom_call.1} parent=31 // pred_fallthru
          _
        // Predicated region
        $region41: #{tpu_custom_call.1} parent=31 // pred_check
          %p201 = pneg %p84
        $region42: #{tpu_custom_call.1} parent=31 // pred_check_branch
          %203 = sbr.rel (%p201) target = $region44
        $region43: #{tpu_custom_call.1} parent=31 // pred_region
          %205 = dma.done [#allocation6], 384
        $region44: #{tpu_custom_call.1} parent=31 // pred_fallthru
          _
        %s206 = sand.u32 %s29, 1
        %s207 = scalar_lea.sflag [#allocation3], %s206
        %s208 = sand.u32 %s29, 1
        %s209 = smul.addr %s208, 8
        %s210 = scalar_lea.vmem [#allocation2], %s209
        %p211 = pneg %p42
        %p212 = pneg %p39
        %p213 = pneg %p63
        %p214 = pneg %p60
        %p215 = pneg %p84
        %p216 = pneg %p81
        %p217 = pneg %p110
        %p218 = pneg %p107
        %s219 = sand.u32 %s97, 1
        %s220 = scalar_lea.sflag [#allocation4], %s219
        %s221 = sand.u32 %s97, 1
        %s222 = smul.addr %s221, 16
        %s223 = scalar_lea.vmem [#allocation8], %s222
        %s224 = smul.u32 2, %s21
        %s225 = smul.u32 2, %s21
        %v226 = vld [vmem:[%s190] sm:$0xf]
        %v227 = vld [vmem:[%s190 + $0x4] sm:$0xf]
        %v228 = vld [vmem:[#allocation5] sm:$0xf]
        %v229 = vld [vmem:[#allocation5 + $0x4] sm:$0xf]
        %v230 = vld [vmem:[#allocation5 + $0x8] sm:$0xf]
        %v231 = vld [vmem:[#allocation5 + $0xc] sm:$0xf]
        %v232 = vld [vmem:[#allocation5 + $0x10] sm:$0xf]
        %v233 = vld [vmem:[#allocation5 + $0x14] sm:$0xf]
        %v234 = vld [vmem:[#allocation5 + $0x18] sm:$0xf]
        %v235 = vld [vmem:[#allocation5 + $0x1c] sm:$0xf]
        %v236 = vld [vmem:[#allocation5 + $0x20] sm:$0xf]
        %v237 = vld [vmem:[#allocation5 + $0x24] sm:$0xf]
        %v238 = vld [vmem:[#allocation5 + $0x28] sm:$0xf]
        %v239 = vld [vmem:[#allocation5 + $0x2c] sm:$0xf]
        %v240 = vld [vmem:[#allocation5 + $0x30] sm:$0xf]
        %v241 = vld [vmem:[#allocation5 + $0x34] sm:$0xf]
        %v242 = vld [vmem:[#allocation5 + $0x38] sm:$0xf]
        %v243 = vld [vmem:[#allocation5 + $0x3c] sm:$0xf]
        %v244 = vld [vmem:[#allocation7] sm:$0x1]
        %v245 = vperm.slane %v244, 0
        %v248 = vunpack.c.l.b16 %v226
        %v249 = vunpack.c.l.b16 %v227
        %v250 = vpack.c.b16 %v249, %v248
        %v268 = vunpack.c.l.b16 %v228
        %v269 = vunpack.c.l.b16 %v229
        %v270 = vunpack.c.l.b16 %v230
        %v271 = vunpack.c.l.b16 %v231
        %v272 = vunpack.c.l.b16 %v232
        %v273 = vunpack.c.l.b16 %v233
        %v274 = vunpack.c.l.b16 %v234
        %v275 = vunpack.c.l.b16 %v235
        %v276 = vunpack.c.l.b16 %v236
        %v277 = vunpack.c.l.b16 %v237
        %v278 = vunpack.c.l.b16 %v238
        %v279 = vunpack.c.l.b16 %v239
        %v280 = vunpack.c.l.b16 %v240
        %v281 = vunpack.c.l.b16 %v241
        %v282 = vunpack.c.l.b16 %v242
        %v283 = vunpack.c.l.b16 %v243
        %v284 = vpack.c.b16 %v269, %v268
        %v285 = vpack.c.b16 %v271, %v270
        %v286 = vpack.c.b16 %v273, %v272
        %v287 = vpack.c.b16 %v275, %v274
        %v288 = vpack.c.b16 %v277, %v276
        %v289 = vpack.c.b16 %v279, %v278
        %v290 = vpack.c.b16 %v281, %v280
        %v291 = vpack.c.b16 %v283, %v282
        %300 = vmatpush.bf16.msra.mxu0 %v291
        %301 = vmatpush.bf16.msra.mxu0 %v290
        %302 = vmatpush.bf16.msra.mxu0 %v289
        %303 = vmatpush.bf16.msra.mxu0 %v288
        %304 = vmatpush.bf16.msra.mxu0 %v287
        %305 = vmatpush.bf16.msra.mxu0 %v286
        %306 = vmatpush.bf16.msra.mxu0 %v285
        %307 = vmatpush.bf16.msra.mxu0 %v284
        %308 = vmatmul.bf16.gmra.mxu0 %v250
        %v309 = vpop.f32.mrf.mxu0
        %v310 = vadd.f32 %v245, %v309
        %v311 = vpop.f32.mrf.mxu0
        %v312 = vadd.f32 %v245, %v311
        %313 = vdwg.mxu0
        %v314 = vmax.f32 %v310, 0.0
        %v315 = vmax.f32 %v312, 0.0
        %v316 = vpack.c.bf16 %v315, %v314
        %v317 = vld [vmem:[#allocation5 + $0x40] sm:$0xf]
        %v318 = vld [vmem:[#allocation5 + $0x44] sm:$0xf]
        %v319 = vld [vmem:[#allocation5 + $0x48] sm:$0xf]
        %v320 = vld [vmem:[#allocation5 + $0x4c] sm:$0xf]
        %v321 = vld [vmem:[#allocation5 + $0x50] sm:$0xf]
        %v322 = vld [vmem:[#allocation5 + $0x54] sm:$0xf]
        %v323 = vld [vmem:[#allocation5 + $0x58] sm:$0xf]
        %v324 = vld [vmem:[#allocation5 + $0x5c] sm:$0xf]
        %v325 = vld [vmem:[#allocation5 + $0x60] sm:$0xf]
        %v326 = vld [vmem:[#allocation5 + $0x64] sm:$0xf]
        %v327 = vld [vmem:[#allocation5 + $0x68] sm:$0xf]
        %v328 = vld [vmem:[#allocation5 + $0x6c] sm:$0xf]
        %v329 = vld [vmem:[#allocation5 + $0x70] sm:$0xf]
        %v330 = vld [vmem:[#allocation5 + $0x74] sm:$0xf]
        %v331 = vld [vmem:[#allocation5 + $0x78] sm:$0xf]
        %v332 = vld [vmem:[#allocation5 + $0x7c] sm:$0xf]
        %v333 = vld [vmem:[#allocation7 + $0x8] sm:$0x1]
        %v334 = vperm.slane %v333, 0
        %v351 = vunpack.c.l.b16 %v317
        %v352 = vunpack.c.l.b16 %v318
        %v353 = vunpack.c.l.b16 %v319
        %v354 = vunpack.c.l.b16 %v320
        %v355 = vunpack.c.l.b16 %v321
        %v356 = vunpack.c.l.b16 %v322
        %v357 = vunpack.c.l.b16 %v323
        %v358 = vunpack.c.l.b16 %v324
        %v359 = vunpack.c.l.b16 %v325
        %v360 = vunpack.c.l.b16 %v326
        %v361 = vunpack.c.l.b16 %v327
        %v362 = vunpack.c.l.b16 %v328
        %v363 = vunpack.c.l.b16 %v329
        %v364 = vunpack.c.l.b16 %v330
        %v365 = vunpack.c.l.b16 %v331
        %v366 = vunpack.c.l.b16 %v332
        %v367 = vpack.c.b16 %v352, %v351
        %v368 = vpack.c.b16 %v354, %v353
        %v369 = vpack.c.b16 %v356, %v355
        %v370 = vpack.c.b16 %v358, %v357
        %v371 = vpack.c.b16 %v360, %v359
        %v372 = vpack.c.b16 %v362, %v361
        %v373 = vpack.c.b16 %v364, %v363
        %v374 = vpack.c.b16 %v366, %v365
        %383 = vmatpush.bf16.msra.mxu0 %v374
        %384 = vmatpush.bf16.msra.mxu0 %v373
        %385 = vmatpush.bf16.msra.mxu0 %v372
        %386 = vmatpush.bf16.msra.mxu0 %v371
        %387 = vmatpush.bf16.msra.mxu0 %v370
        %388 = vmatpush.bf16.msra.mxu0 %v369
        %389 = vmatpush.bf16.msra.mxu0 %v368
        %390 = vmatpush.bf16.msra.mxu0 %v367
        %391 = vmatmul.bf16.gmra.mxu0 %v316
        %v392 = vpop.f32.mrf.mxu0
        %v393 = vadd.f32 %v334, %v392
        %v394 = vpop.f32.mrf.mxu0
        %v395 = vadd.f32 %v334, %v394
        %396 = vdwg.mxu0
        %v397 = vmax.f32 %v393, 0.0
        %v398 = vmax.f32 %v395, 0.0
        %v399 = vpack.c.bf16 %v398, %v397
        %v400 = vld [vmem:[#allocation5 + $0x80] sm:$0xf]
        %v401 = vld [vmem:[#allocation5 + $0x84] sm:$0xf]
        %v402 = vld [vmem:[#allocation5 + $0x88] sm:$0xf]
        %v403 = vld [vmem:[#allocation5 + $0x8c] sm:$0xf]
        %v404 = vld [vmem:[#allocation5 + $0x90] sm:$0xf]
        %v405 = vld [vmem:[#allocation5 + $0x94] sm:$0xf]
        %v406 = vld [vmem:[#allocation5 + $0x98] sm:$0xf]
        %v407 = vld [vmem:[#allocation5 + $0x9c] sm:$0xf]
        %v408 = vld [vmem:[#allocation5 + $0xa0] sm:$0xf]
        %v409 = vld [vmem:[#allocation5 + $0xa4] sm:$0xf]
        %v410 = vld [vmem:[#allocation5 + $0xa8] sm:$0xf]
        %v411 = vld [vmem:[#allocation5 + $0xac] sm:$0xf]
        %v412 = vld [vmem:[#allocation5 + $0xb0] sm:$0xf]
        %v413 = vld [vmem:[#allocation5 + $0xb4] sm:$0xf]
        %v414 = vld [vmem:[#allocation5 + $0xb8] sm:$0xf]
        %v415 = vld [vmem:[#allocation5 + $0xbc] sm:$0xf]
        %v416 = vld [vmem:[#allocation7 + $0x10] sm:$0x1]
        %v417 = vperm.slane %v416, 0
        %v434 = vunpack.c.l.b16 %v400
        %v435 = vunpack.c.l.b16 %v401
        %v436 = vunpack.c.l.b16 %v402
        %v437 = vunpack.c.l.b16 %v403
        %v438 = vunpack.c.l.b16 %v404
        %v439 = vunpack.c.l.b16 %v405
        %v440 = vunpack.c.l.b16 %v406
        %v441 = vunpack.c.l.b16 %v407
        %v442 = vunpack.c.l.b16 %v408
        %v443 = vunpack.c.l.b16 %v409
        %v444 = vunpack.c.l.b16 %v410
        %v445 = vunpack.c.l.b16 %v411
        %v446 = vunpack.c.l.b16 %v412
        %v447 = vunpack.c.l.b16 %v413
        %v448 = vunpack.c.l.b16 %v414
        %v449 = vunpack.c.l.b16 %v415
        %v450 = vpack.c.b16 %v435, %v434
        %v451 = vpack.c.b16 %v437, %v436
        %v452 = vpack.c.b16 %v439, %v438
        %v453 = vpack.c.b16 %v441, %v440
        %v454 = vpack.c.b16 %v443, %v442
        %v455 = vpack.c.b16 %v445, %v444
        %v456 = vpack.c.b16 %v447, %v446
        %v457 = vpack.c.b16 %v449, %v448
        %466 = vmatpush.bf16.msra.mxu0 %v457
        %467 = vmatpush.bf16.msra.mxu0 %v456
        %468 = vmatpush.bf16.msra.mxu0 %v455
        %469 = vmatpush.bf16.msra.mxu0 %v454
        %470 = vmatpush.bf16.msra.mxu0 %v453
        %471 = vmatpush.bf16.msra.mxu0 %v452
        %472 = vmatpush.bf16.msra.mxu0 %v451
        %473 = vmatpush.bf16.msra.mxu0 %v450
        %474 = vmatmul.bf16.gmra.mxu0 %v399
        %v475 = vpop.f32.mrf.mxu0
        %v476 = vadd.f32 %v417, %v475
        %v477 = vpop.f32.mrf.mxu0
        %v478 = vadd.f32 %v417, %v477
        %479 = vdwg.mxu0
        %v480 = vlaneseq
        %v481 = vand.u32 %v480, 127
        %vm482 = vcmp.lt.s32.totalorder %v481, 16
        %v483 = vsel %vm482, %v476, -1e+30
        %v484 = vsel %vm482, %v478, -1e+30
        %485 = vmax.xlane.f32.xlu0 %v483
        %v486 = vpop.xlane.xlu0 %485
        %487 = vmax.xlane.f32.xlu0 %v484
        %v488 = vpop.xlane.xlu0 %487
        %v489 = vsub.f32 %v483, %v486
        %v490 = vsub.f32 %v484, %v488
        %v491 = vmul.f32 %v489, 1.442695
        %v492 = vpow.pop %v491
        %v493 = vmul.f32 %v490, 1.442695
        %v494 = vpow.pop %v493
        %495 = vadd.xlane.f32.xlu0 %v492
        %v496 = vpop.xlane.xlu0 %495
        %497 = vadd.xlane.f32.xlu0 %v494
        %v498 = vpop.xlane.xlu0 %497
        %v499 = vrcp.pop %v496
        %v500 = vrcp.pop %v498
        %v501 = vmul.f32 %v492, %v499
        %v502 = vmul.f32 %v494, %v500
        %503 = vst [vmem:[%s223] sm:$0xff] %v501
        %504 = vst [vmem:[%s223 + $0x8] sm:$0xff] %v502
        %s505 = sand.u32 %s97, 1
        %s506 = scalar_lea.sflag [#allocation4], %s505
        %s507 = sand.u32 %s97, 1
        %s508 = smul.addr %s507, 16
        %s509 = scalar_lea.vmem [#allocation8], %s508
        // Predicated region
        $region45: #{tpu_custom_call.1} parent=31 // pred_check
          %p510 = pneg %p107
        $region46: #{tpu_custom_call.1} parent=31 // pred_check_branch
          %512 = sbr.rel (%p510) target = $region48
        $region47: #{tpu_custom_call.1} parent=31 // pred_region
          %s513 = smul.u32 2, %s21
          %515 = vsyncadd %s506, 0
          %s516 = smul.addr %s513, 8
          %s517 = scalar_lea.hbm %s3, %s516
          %s518 = sshll.u32 %s509, 4
          %s519 = int_to_ptr.vmem [resolvable:$true] %s518
          %s520 = sshll.u32 %s517, 4
          %s521 = int_to_ptr.hbm [resolvable:$true] %s520
          %526 = dma.vmem_to_hbm [thread:$0]  %s519, 256, %s521, %s506, 128, 128, 8
        $region48: #{tpu_custom_call.1} parent=31 // pred_fallthru
          _
      $region32: #{tpu_custom_call.1} parent=5 // pred_fallthru
        _
      %p527 = scmp.le.s32.totalorder 2, %s16
      // Predicated region
      $region49: #{tpu_custom_call.1} parent=5 // pred_check
        %p528 = pneg %p527
      $region50: #{tpu_custom_call.1} parent=5 // pred_check_branch
        %530 = sbr.rel (%p528) target = $region52
      $region51: #{tpu_custom_call.1} parent=5 // pred_region
        %s531 = ssub.s32 %s16, 2
        // Predicated region
        $region53: #{tpu_custom_call.1} parent=51 // pred_check
          %p532 = pneg %p113
        $region54: #{tpu_custom_call.1} parent=51 // pred_check_branch
          %534 = sbr.rel (%p532) target = $region56
        $region55: #{tpu_custom_call.1} parent=51 // pred_region
          %s535 = sand.u32 %s98, 1
          %s536 = scalar_lea.sflag [#allocation4], %s535
          %s537 = sand.u32 %s98, 1
          %s538 = smul.addr %s537, 16
          %s539 = scalar_lea.vmem [#allocation8], %s538
          %541 = dma.done %s536, 256
        $region56: #{tpu_custom_call.1} parent=51 // pred_fallthru
          _
      $region52: #{tpu_custom_call.1} parent=5 // pred_fallthru
        _
    $region6: #{tpu_custom_call.1} parent=1 // loop_footer
      %s20 = sadd.s32 1, %s16
    $region7: #{tpu_custom_call.1} parent=1 // loop_footer_branch
      %15 = sbr.rel target = $region3
    $region8: #{tpu_custom_call.1} parent=1 // loop_exit
      _
    %542 = vsyncpa [#allocation3], 1
    %s543 = scalar_lea.sflag [#allocation3], 1
    %544 = vsyncpa %s543, 1
    %545 = vsyncpa [#allocation6], 1
    %546 = vsyncpa [#allocation4], 1
    %s547 = scalar_lea.sflag [#allocation4], 1
    %548 = vsyncpa %s547, 1

</llo_original>
